<compile_context>
chip_gen: v5e
topology: v5e:2x2
jax: 0.10.0
libtpu: 0.0.40
codegen_flags: <defaults>
</compile_context>

<pallas_src>
import functools
import math

import jax
import jax.numpy as jnp
from jax.experimental import pallas as pl
from jax.experimental.pallas import tpu as pltpu

_MIB = 1024 * 1024


def _round_up(x, m):
    return ((x + m - 1) // m) * m


def _balanced_tile(extent, unit, cap):
    """Split round_up(extent, unit) into equal blocks that are multiples of
    `unit`, each <= max(unit, cap), minimizing padding.

    Returns (tile, padded_extent) with padded_extent % tile == 0.
    """
    ext_u = _round_up(max(int(extent), 1), unit)
    cap_u = max(unit, (int(cap) // unit) * unit)
    n_blocks = max(1, math.ceil(ext_u / cap_u))
    tile = _round_up(math.ceil(ext_u / n_blocks), unit)
    return tile, n_blocks * tile


def _vmem_capacity_bytes():
    try:
        return int(pltpu.get_tpu_info().vmem_capacity_bytes)
    except Exception:
        return 64 * _MIB  # conservative fallback (v7x per-TensorCore VMEM)


def _global_avg_pool_kernel(x_ref, o_ref, acc_ref, *, inv_n):
    # x_ref  : (tb, tn, td)  input tile (one slab of the reduction axis)
    # o_ref  : (tb, td)      output tile (block index constant along N axis)
    # acc_ref: (tb, td) f32  running partial sum, persists across N-tiles
    n_idx = pl.program_id(2)

    @pl.when(n_idx == 0)
    def _():
        acc_ref[...] = jnp.zeros_like(acc_ref)

    # Partial sum over this N-tile; accumulate in f32 regardless of input dtype.
    acc_ref[...] += jnp.sum(x_ref[...].astype(jnp.float32), axis=1)

    @pl.when(n_idx == pl.num_programs(2) - 1)
    def _():
        # Fold the 1/N scale in exactly once, on the small (tb, td) tensor.
        o_ref[...] = (acc_ref[...] * inv_n).astype(o_ref.dtype)


def global_avg_pool(x, *, max_block_bytes=None):
    """Pallas TPU implementation of torch.mean(x, dim=1).

    x: (B, N, ...) -> output (B, ...). Trailing feature dims are flattened into
    one lane-dense axis for the kernel and restored afterwards.
    """
    orig_shape = x.shape
    if x.ndim < 2:
        raise ValueError("global_avg_pool expects rank >= 2")
    B, N = orig_shape[0], orig_shape[1]
    D = math.prod(orig_shape[2:]) if x.ndim > 2 else 1
    x3 = x.reshape(B, N, D)

    itemsize = jnp.dtype(x.dtype).itemsize
    # Packed-sublane unit for the reduction axis: 8 f32, 16 bf16, 32 int8/fp8.
    n_unit = max(8, 32 // itemsize)

    vmem_cap = _vmem_capacity_bytes()
    if max_block_bytes is None:
        # ~12.8 MiB on v7x (64 MiB VMEM), 16 MiB on v5e/v6e (128 MiB VMEM).
        max_block_bytes = min(16 * _MIB, vmem_cap // 5)
    budget = max(int(max_block_bytes), 128 * 1024)

    # Feature (lane) axis: prefer full D so each (b, n) row is one contiguous
    # HBM run; only split into balanced 128-multiples when a minimal
    # (8 x n_unit x D) tile would already exceed the budget.
    if 8 * n_unit * D * itemsize <= budget:
        td, D_pad = D, D
    else:
        td_cap = budget // (8 * n_unit * itemsize)
        td, D_pad = _balanced_tile(D, 128, td_cap)

    # Reduction (N) axis: grow tn first — it only adds pipelined DMA bytes,
    # not accumulator read-modify-write traffic.
    tn_cap = budget // (8 * td * itemsize)
    tn, N_pad = _balanced_tile(N, n_unit, tn_cap)

    # Batch axis: soak up whatever budget remains (this fattens the block when
    # N is small so the ~0.35 us per-grid-step overhead is amortized).
    tb_cap = budget // (tn * td * itemsize)
    tb, B_pad = _balanced_tile(B, 8, tb_cap)

    # Megacore (v7x): ensure the two "parallel" grid axes expose >= 2 blocks so
    # the second TensorCore isn't idle; a single extra grid step is negligible
    # on single-TC chips.
    if (B_pad // tb) * (D_pad // td) < 2:
        if tb >= 16:
            tb, B_pad = _balanced_tile(B, 8, tb // 2)
        elif td >= 256:
            td, D_pad = _balanced_tile(D, 128, td // 2)
        # else: B and D are both tiny; a cross-core N-split + combine is not
        # worth it for this memory-bound op.

    # Zero-pad up to tile multiples: zero atom rows do not change the sum (and
    # inv_n uses the true N); padded batch rows / feature cols are sliced off.
    pad_b, pad_n, pad_d = B_pad - B, N_pad - N, D_pad - D
    if pad_b or pad_n or pad_d:
        x3 = jnp.pad(x3, ((0, pad_b), (0, pad_n), (0, pad_d)))

    grid = (B_pad // tb, D_pad // td, N_pad // tn)
    kernel = functools.partial(_global_avg_pool_kernel, inv_n=1.0 / float(N))

    # Explicit VMEM limit: double-buffered input block + double-buffered output
    # block + f32 accumulator + slack, clamped under physical capacity.
    need = (2 * tb * tn * td * itemsize
            + 2 * tb * td * itemsize
            + tb * td * 4
            + 4 * _MIB)
    vmem_limit = int(min(max(need, 32 * _MIB), 0.75 * vmem_cap))

    in_bytes = B_pad * N_pad * D_pad * itemsize
    out_bytes = B_pad * D_pad * itemsize

    out = pl.pallas_call(
        kernel,
        out_shape=jax.ShapeDtypeStruct((B_pad, D_pad), x.dtype),
        grid_spec=pltpu.PrefetchScalarGridSpec(
            num_scalar_prefetch=0,
            grid=grid,
            in_specs=[pl.BlockSpec((tb, tn, td), lambda b, d, n: (b, n, d))],
            out_specs=pl.BlockSpec((tb, td), lambda b, d, n: (b, d)),
            scratch_shapes=[pltpu.VMEM((tb, td), jnp.float32)],
        ),
        compiler_params=pltpu.CompilerParams(
            dimension_semantics=("parallel", "parallel", "arbitrary"),
            vmem_limit_bytes=vmem_limit),
        cost_estimate=pl.CostEstimate(
            flops=B_pad * N_pad * D_pad,
            transcendentals=0,
            bytes_accessed=in_bytes + out_bytes),
    )(x3)

    out = out[:B, :D]
    return out.reshape((B,) + tuple(orig_shape[2:]))


if __name__ == "__main__":
    key = jax.random.PRNGKey(0)

    # 1) CGCNN-style input: (batch graphs, atoms per graph, atom feature length)
    B, N, D = 4, 24, 128
    x = jax.random.normal(key, (B, N, D), dtype=jnp.float32)
    out = jax.block_until_ready(global_avg_pool(x))
    ref = jnp.mean(x, axis=1)
    assert out.shape == (B, D)
    assert jnp.allclose(out, ref, rtol=1e-5, atol=1e-5), "mismatch (basic)"

    # 2) Non-divisible B/N/D -> exercises zero-padding path.
    x2 = jax.random.normal(jax.random.PRNGKey(1), (3, 50, 96), dtype=jnp.float32)
    out2 = jax.block_until_ready(global_avg_pool(x2))
    ref2 = jnp.mean(x2, axis=1)
    assert out2.shape == (3, 96)
    assert jnp.allclose(out2, ref2, rtol=1e-5, atol=1e-5), "mismatch (padded)"

    # 3) Small budget -> tiled reduction across the "arbitrary" grid axis with
    #    the persistent VMEM accumulator (plus the megacore D-split).
    x3 = jax.random.normal(jax.random.PRNGKey(2), (8, 512, 256), dtype=jnp.float32)
    out3 = jax.block_until_ready(global_avg_pool(x3, max_block_bytes=256 * 1024))
    ref3 = jnp.mean(x3, axis=1)
    assert jnp.allclose(out3, ref3, rtol=1e-5, atol=1e-5), "mismatch (tiled N)"

    # 4) bf16 input -> dtype-aware (16-row) reduction tile + f32 accumulation.
    x4 = jax.random.normal(jax.random.PRNGKey(3), (2, 40, 128)).astype(jnp.bfloat16)
    out4 = jax.block_until_ready(global_avg_pool(x4))
    ref4 = jnp.mean(x4.astype(jnp.float32), axis=1).astype(jnp.bfloat16)
    assert jnp.allclose(out4.astype(jnp.float32), ref4.astype(jnp.float32),
                        rtol=2e-2, atol=2e-2), "mismatch (bf16)"

    # TODO(synk): integer inputs are not supported (torch.mean rejects them too).
    print("KERNEL_OK")
</pallas_src>

<mosaic_0001>
module attributes {stable_mosaic.version = 11 : i64} {
  func.func @_global_avg_pool_kernel(%arg0: i32, %arg1: i32, %arg2: i32, %arg3: memref<8x24x128xf32, #tpu.memory_space<vmem>>, %arg4: memref<8x128xf32, #tpu.memory_space<vmem>>, %arg5: memref<8x128xf32, #tpu.memory_space<vmem>>) attributes {dimension_semantics = [#tpu.dimension_semantics<parallel>, #tpu.dimension_semantics<parallel>, #tpu.dimension_semantics<arbitrary>], iteration_bounds = array<i64: 1, 1, 1>, scalar_prefetch = 0 : i64, scratch_operands = 1 : i64, tpu.core_type = #tpu.core_type<tc>, window_params = [{transform_indices = @transform_0, window_bounds = array<i64: 8, 24, 128>}, {transform_indices = @transform_1, window_bounds = array<i64: 8, 128>}]} {
    %c0_i32 = arith.constant 0 : i32
    %0 = arith.cmpi eq, %arg2, %c0_i32 : i32
    %1 = arith.extui %0 : i1 to i32
    %c0_i32_0 = arith.constant 0 : i32
    %2 = arith.cmpi ne, %1, %c0_i32_0 : i32
    scf.if %2 {
      %cst_9 = arith.constant 0.000000e+00 : f32
      %11 = vector.broadcast %cst_9 : f32 to vector<8x128xf32>
      %c0_10 = arith.constant 0 : index
      %c0_11 = arith.constant 0 : index
      %12 = vector.load %arg5[%c0_10, %c0_11] : memref<8x128xf32, #tpu.memory_space<vmem>>, vector<8x128xf32>
      tpu.vector_store %arg5[%c0_10, %c0_11], %11 {strides = array<i32>} : memref<8x128xf32, #tpu.memory_space<vmem>>, vector<8x128xf32>,
    } else {
    }
    %c0 = arith.constant 0 : index
    %c0_1 = arith.constant 0 : index
    %3 = vector.load %arg5[%c0, %c0_1] : memref<8x128xf32, #tpu.memory_space<vmem>>, vector<8x128xf32>
    %c0_2 = arith.constant 0 : index
    %c0_3 = arith.constant 0 : index
    %c0_4 = arith.constant 0 : index
    %4 = vector.load %arg3[%c0_2, %c0_3, %c0_4] : memref<8x24x128xf32, #tpu.memory_space<vmem>>, vector<8x24x128xf32>
    %cst = arith.constant dense<0.000000e+00> : vector<8x128xf32>
    %5 = vector.multi_reduction <add>, %4, %cst [1] : vector<8x24x128xf32> to vector<8x128xf32>
    %6 = arith.addf %3, %5 : vector<8x128xf32>
    %c0_5 = arith.constant 0 : index
    %c0_6 = arith.constant 0 : index
    %7 = vector.load %arg5[%c0_5, %c0_6] : memref<8x128xf32, #tpu.memory_space<vmem>>, vector<8x128xf32>
    tpu.vector_store %arg5[%c0_5, %c0_6], %6 {strides = array<i32>} : memref<8x128xf32, #tpu.memory_space<vmem>>, vector<8x128xf32>,
    %c0_i32_7 = arith.constant 0 : i32
    %8 = arith.cmpi eq, %arg2, %c0_i32_7 : i32
    %9 = arith.extui %8 : i1 to i32
    %c0_i32_8 = arith.constant 0 : i32
    %10 = arith.cmpi ne, %9, %c0_i32_8 : i32
    scf.if %10 {
      %c0_9 = arith.constant 0 : index
      %c0_10 = arith.constant 0 : index
      %11 = vector.load %arg5[%c0_9, %c0_10] : memref<8x128xf32, #tpu.memory_space<vmem>>, vector<8x128xf32>
      %cst_11 = arith.constant 0.0416666679 : f32
      %12 = vector.broadcast %cst_11 : f32 to vector<8x128xf32>
      %13 = arith.mulf %11, %12 : vector<8x128xf32>
      %c0_12 = arith.constant 0 : index
      %c0_13 = arith.constant 0 : index
      %14 = vector.load %arg4[%c0_12, %c0_13] : memref<8x128xf32, #tpu.memory_space<vmem>>, vector<8x128xf32>
      tpu.vector_store %arg4[%c0_12, %c0_13], %13 {strides = array<i32>} : memref<8x128xf32, #tpu.memory_space<vmem>>, vector<8x128xf32>,
    } else {
    }
    return
  }
  func.func @transform_0(%arg0: i32, %arg1: i32, %arg2: i32) -> (i32, i32, i32) {
    %c0_i32 = arith.constant 0 : i32
    return %arg0, %arg2, %arg1 : i32, i32, i32
  }
  func.func @transform_1(%arg0: i32, %arg1: i32, %arg2: i32) -> (i32, i32) {
    %c0_i32 = arith.constant 0 : i32
    return %arg0, %arg1 : i32, i32
  }
}

</mosaic_0001>

<llo_original>
// kernel: tpu_custom_call.1
$region0: #{tpu_custom_call.1}
  #allocation0 [shape = 'u32[]', space=smem, size = 0x4, offset = 0x4, fixed_abs, tag = 'smem constant byte address 0x4 - core index']
  #allocation1 [shape = 'u32[72,128]{1,0:T(1,128)}', space=vmem, size = 0x9000, scoped, tag = 'internal scratch']
  #allocation2 [shape = 'f32[8,128]{1,0:T(8,128)}', space=vmem, size = 0x1000, scoped, tag = 'scratch operand']
  %s0 = inlined_call_operand.hbm [shape: f32[8,24,128], index: 0, kind: input, shape index: {}]
  %s1 = inlined_call_operand.hbm [shape: f32[8,128], index: 1, kind: output, shape index: {}]
  %s2 = sld [smem:[#allocation0]]
  $region26: #{tpu_custom_call.1} parent=0
    _
  %s4 = ssub.s32 1, %s2
  %s5 = scalar_select 0, %s4, %s2
  $region1: #{tpu_custom_call.1} parent=0
    #allocation3 [shape = 'u8[98304]{0}', space=vmem, size = 0x18000, scoped, tag = 'input window, operand 0, single buffered']
    #allocation4 [shape = 's32[1]{0}', space=sflag, size = 0x4, scoped, tag = 'scoped memory for tpu_custom_call.1']
    #allocation5 [shape = 's32[1]{0}', space=sflag, size = 0x4, scoped, tag = 'scoped memory for tpu_custom_call.1']
    #allocation6 [shape = 'u8[4096]{0}', space=vmem, size = 0x1000, scoped, tag = 'output window, operand 0, single buffered']
    %6 = vsyncpa [#allocation4], 0
    %7 = vsyncpa [#allocation5], 0
    // Predicated region
    $region2: #{tpu_custom_call.1} parent=1 // pred_check
      _
    $region3: #{tpu_custom_call.1} parent=1 // pred_check_branch
      %9 = sbr.rel (0) target = $region5
    $region4: #{tpu_custom_call.1} parent=1 // pred_region
      %11 = vsyncadd [#allocation4], 0
      %s12 = sshll.u32 %s0, 4
      %s13 = int_to_ptr.hbm [resolvable:$true] %s12
      %s14 = sshll.u32 [#allocation3], 4
      %s15 = int_to_ptr.vmem [resolvable:$true] %s14
      %20 = dma.hbm_to_vmem [thread:$0]  %s13, 3072, %s15, [#allocation4], 128, 128, 8
    $region5: #{tpu_custom_call.1} parent=1 // pred_fallthru
      _
    // Predicated region
    $region6: #{tpu_custom_call.1} parent=1 // pred_check
      _
    $region7: #{tpu_custom_call.1} parent=1 // pred_check_branch
      %22 = sbr.rel (0) target = $region9
    $region8: #{tpu_custom_call.1} parent=1 // pred_region
      %24 = dma.done [#allocation4], 3072
    $region9: #{tpu_custom_call.1} parent=1 // pred_fallthru
      _
    %p25 = scmp.eq.s32.totalorder 0, 0
    // Predicated region
    $region10: #{tpu_custom_call.1} parent=1 // pred_check
      %p26 = pneg %p25
    $region11: #{tpu_custom_call.1} parent=1 // pred_check_branch
      %28 = sbr.rel (%p26) target = $region13
    $region12: #{tpu_custom_call.1} parent=1 // pred_region
      %29 = vst [vmem:[#allocation2] sm:$0xff] 0.0
    $region13: #{tpu_custom_call.1} parent=1 // pred_fallthru
      _
    %v30 = vld [vmem:[#allocation2] sm:$0xff]
    %v31 = vld [vmem:[#allocation3] sm:$0xff]
    %v32 = vld [vmem:[#allocation3 + $0x8] sm:$0xff]
    %v33 = vld [vmem:[#allocation3 + $0x10] sm:$0xff]
    %v34 = vld [vmem:[#allocation3 + $0x18] sm:$0xff]
    %v35 = vld [vmem:[#allocation3 + $0x20] sm:$0xff]
    %v36 = vld [vmem:[#allocation3 + $0x28] sm:$0xff]
    %v37 = vld [vmem:[#allocation3 + $0x30] sm:$0xff]
    %v38 = vld [vmem:[#allocation3 + $0x38] sm:$0xff]
    %v39 = vld [vmem:[#allocation3 + $0x40] sm:$0xff]
    %v40 = vld [vmem:[#allocation3 + $0x48] sm:$0xff]
    %v41 = vld [vmem:[#allocation3 + $0x50] sm:$0xff]
    %v42 = vld [vmem:[#allocation3 + $0x58] sm:$0xff]
    %v43 = vld [vmem:[#allocation3 + $0x60] sm:$0xff]
    %v44 = vld [vmem:[#allocation3 + $0x68] sm:$0xff]
    %v45 = vld [vmem:[#allocation3 + $0x70] sm:$0xff]
    %v46 = vld [vmem:[#allocation3 + $0x78] sm:$0xff]
    %v47 = vld [vmem:[#allocation3 + $0x80] sm:$0xff]
    %v48 = vld [vmem:[#allocation3 + $0x88] sm:$0xff]
    %v49 = vld [vmem:[#allocation3 + $0x90] sm:$0xff]
    %v50 = vld [vmem:[#allocation3 + $0x98] sm:$0xff]
    %v51 = vld [vmem:[#allocation3 + $0xa0] sm:$0xff]
    %v52 = vld [vmem:[#allocation3 + $0xa8] sm:$0xff]
    %v53 = vld [vmem:[#allocation3 + $0xb0] sm:$0xff]
    %v54 = vld [vmem:[#allocation3 + $0xb8] sm:$0xff]
    %v55 = vadd.f32 %v31, %v32
    %v56 = vadd.f32 %v55, %v33
    %v57 = vrot.slane %v56, 4
    %v58 = vadd.f32 %v56, %v57
    %v59 = vrot.slane %v58, 2
    %v60 = vadd.f32 %v58, %v59
    %v61 = vrot.slane %v60, 1
    %v62 = vadd.f32 %v60, %v61
    %v63 = vadd.f32 %v34, %v35
    %v64 = vadd.f32 %v63, %v36
    %v65 = vrot.slane %v64, 4
    %v66 = vadd.f32 %v64, %v65
    %v67 = vrot.slane %v66, 2
    %v68 = vadd.f32 %v66, %v67
    %v69 = vrot.slane %v68, 1
    %v70 = vadd.f32 %v68, %v69
    %v71 = vadd.f32 %v37, %v38
    %v72 = vadd.f32 %v71, %v39
    %v73 = vrot.slane %v72, 4
    %v74 = vadd.f32 %v72, %v73
    %v75 = vrot.slane %v74, 2
    %v76 = vadd.f32 %v74, %v75
    %v77 = vrot.slane %v76, 1
    %v78 = vadd.f32 %v76, %v77
    %v79 = vadd.f32 %v40, %v41
    %v80 = vadd.f32 %v79, %v42
    %v81 = vrot.slane %v80, 4
    %v82 = vadd.f32 %v80, %v81
    %v83 = vrot.slane %v82, 2
    %v84 = vadd.f32 %v82, %v83
    %v85 = vrot.slane %v84, 1
    %v86 = vadd.f32 %v84, %v85
    %v87 = vadd.f32 %v43, %v44
    %v88 = vadd.f32 %v87, %v45
    %v89 = vrot.slane %v88, 4
    %v90 = vadd.f32 %v88, %v89
    %v91 = vrot.slane %v90, 2
    %v92 = vadd.f32 %v90, %v91
    %v93 = vrot.slane %v92, 1
    %v94 = vadd.f32 %v92, %v93
    %v95 = vadd.f32 %v46, %v47
    %v96 = vadd.f32 %v95, %v48
    %v97 = vrot.slane %v96, 4
    %v98 = vadd.f32 %v96, %v97
    %v99 = vrot.slane %v98, 2
    %v100 = vadd.f32 %v98, %v99
    %v101 = vrot.slane %v100, 1
    %v102 = vadd.f32 %v100, %v101
    %v103 = vadd.f32 %v49, %v50
    %v104 = vadd.f32 %v103, %v51
    %v105 = vrot.slane %v104, 4
    %v106 = vadd.f32 %v104, %v105
    %v107 = vrot.slane %v106, 2
    %v108 = vadd.f32 %v106, %v107
    %v109 = vrot.slane %v108, 1
    %v110 = vadd.f32 %v108, %v109
    %v111 = vadd.f32 %v52, %v53
    %v112 = vadd.f32 %v111, %v54
    %v113 = vrot.slane %v112, 4
    %v114 = vadd.f32 %v112, %v113
    %v115 = vrot.slane %v114, 2
    %v116 = vadd.f32 %v114, %v115
    %v117 = vrot.slane %v116, 1
    %v118 = vadd.f32 %v116, %v117
    %vm127 = vcmask 1041409
    %v128 = vsel %vm127, %v70, %v62
    %vm129 = vcmask 1042434
    %v130 = vsel %vm129, %v78, %v128
    %vm131 = vcmask 1043459
    %v132 = vsel %vm131, %v86, %v130
    %vm133 = vcmask 1044484
    %v134 = vsel %vm133, %v94, %v132
    %vm135 = vcmask 1045509
    %v136 = vsel %vm135, %v102, %v134
    %vm137 = vcmask 1046534
    %v138 = vsel %vm137, %v110, %v136
    %vm139 = vcmask 1047559
    %v140 = vsel %vm139, %v118, %v138
    %v142 = vadd.f32 %v30, %v140
    %143 = vst [vmem:[#allocation2] sm:$0xff] %v142
    // Predicated region
    $region14: #{tpu_custom_call.1} parent=1 // pred_check
      %p144 = pneg %p25
    $region15: #{tpu_custom_call.1} parent=1 // pred_check_branch
      %146 = sbr.rel (%p144) target = $region17
    $region16: #{tpu_custom_call.1} parent=1 // pred_region
      %v147 = vld [vmem:[#allocation2] sm:$0xff]
      %v148 = vmul.f32 %v147, 0.041666668
      %149 = vst [vmem:[#allocation6] sm:$0xff] %v148
    $region17: #{tpu_custom_call.1} parent=1 // pred_fallthru
      _
    // Predicated region
    $region18: #{tpu_custom_call.1} parent=1 // pred_check
      _
    $region19: #{tpu_custom_call.1} parent=1 // pred_check_branch
      %151 = sbr.rel (0) target = $region21
    $region20: #{tpu_custom_call.1} parent=1 // pred_region
      %153 = vsyncadd [#allocation5], 0
      %s155 = sshll.u32 [#allocation6], 4
      %s156 = int_to_ptr.vmem [resolvable:$true] %s155
      %s157 = sshll.u32 %s1, 4
      %s158 = int_to_ptr.hbm [resolvable:$true] %s157
      %160 = dma.vmem_to_hbm [thread:$0]  %s156, 128, %s158, [#allocation5]
    $region21: #{tpu_custom_call.1} parent=1 // pred_fallthru
      _
    // Predicated region
    $region22: #{tpu_custom_call.1} parent=1 // pred_check
      _
    $region23: #{tpu_custom_call.1} parent=1 // pred_check_branch
      %162 = sbr.rel (0) target = $region25
    $region24: #{tpu_custom_call.1} parent=1 // pred_region
      %164 = dma.done [#allocation5], 128
    $region25: #{tpu_custom_call.1} parent=1 // pred_fallthru
      _
    %165 = vsyncpa [#allocation4], 1
    %166 = vsyncpa [#allocation5], 1

</llo_original>
